<compile_context>
chip_gen: v7x
topology: tpu7x:2x2x1
jax: 0.10.0
libtpu: 0.0.40
codegen_flags: <defaults>
</compile_context>

<pallas_src>
import functools

import jax
import jax.numpy as jnp
from jax import lax
from jax.experimental import pallas as pl
from jax.experimental.pallas import tpu as pltpu

BN_EPS = 1e-3


def _pick_tile_m(m, target):
    """Largest divisor of m that is a multiple of 8 and <= target (else m)."""
    if m <= target:
        return m
    hi = max(8, min(target, m))
    for cand in range(hi, 7, -1):
        if m % cand == 0 and cand % 8 == 0:
            return cand
    return m  # fallback: single full-extent block (always a legal block shape)


def _vmem_limit(tile_bytes):
    # Explicit scoped-VMEM limit: headroom for double buffering, but capped
    # well under v7x's 64 MiB physical VMEM (v5e/v6e have 128 MiB).
    return int(min(48 * 1024 * 1024, max(32 * 1024 * 1024, 8 * tile_bytes)))


# -----------------------------------------------------------------------------
# Pass 1: per-channel sum / sum-of-squares of y = x @ w   (BN batch statistics)
# -----------------------------------------------------------------------------
def _stats_kernel(x_ref, w_ref, sum_ref, sq_ref):
    @pl.when(pl.program_id(0) == 0)
    def _():
        sum_ref[...] = jnp.zeros_like(sum_ref)
        sq_ref[...] = jnp.zeros_like(sq_ref)

    y = jnp.dot(x_ref[...], w_ref[...], preferred_element_type=jnp.float32)
    sum_ref[...] += jnp.sum(y, axis=0, keepdims=True)
    sq_ref[...] += jnp.sum(y * y, axis=0, keepdims=True)


# -----------------------------------------------------------------------------
# Pass 2a: matmul + folded BN affine + MaxUnpool2d(2,2) (four lane-stacked slots)
# -----------------------------------------------------------------------------
def _unpool_kernel(x_ref, idx_ref, w_ref, b_ref, out_ref, *, w_in, h_in, out_w):
    # 1x1 conv (+ folded BN) on this M-tile.
    y = (jnp.dot(x_ref[...], w_ref[...], preferred_element_type=jnp.float32)
         + b_ref[...])                                            # (TM, Cout)

    # Flat index (inside the 2H x 2W plane) of the top-left cell of each row's
    # 2x2 unpool block, derived in-kernel from the global row id.
    tm = x_ref.shape[0]
    t = lax.broadcasted_iota(jnp.int32, (tm, 1), 0)
    m = pl.program_id(0) * tm + t                                 # global row id
    ph = (m // w_in) % h_in
    pw = m % w_in
    base = 2 * ph * out_w + 2 * pw                                # (TM, 1)

    off = idx_ref[...] - base                                     # (TM, Cout)
    out_ref[...] = jnp.concatenate(
        [jnp.where(off == 0, y, 0.0),           # (dr, dc) = (0, 0)
         jnp.where(off == 1, y, 0.0),           # (0, 1)
         jnp.where(off == out_w, y, 0.0),       # (1, 0)
         jnp.where(off == out_w + 1, y, 0.0)],  # (1, 1)
        axis=-1).astype(out_ref.dtype)                            # (TM, 4*Cout)


# -----------------------------------------------------------------------------
# Pass 2b: matmul + folded BN affine only (module branch without unpool)
# -----------------------------------------------------------------------------
def _affine_kernel(x_ref, w_ref, b_ref, out_ref):
    out_ref[...] = (jnp.dot(x_ref[...], w_ref[...],
                            preferred_element_type=jnp.float32)
                    + b_ref[...]).astype(out_ref.dtype)


# -----------------------------------------------------------------------------
# Wrapper: mirrors DecoderOtherPath.forward.  NCHW in / NCHW out (PyTorch).
# -----------------------------------------------------------------------------
def decoder_other_path(x_nchw, conv_weight, bn_gamma, bn_beta,
                       pool_indices_nchw=None, upsample=True,
                       tile_m=1024, compute_dtype=jnp.float32):
    n, cin, h, w = x_nchw.shape
    cout = conv_weight.shape[0]

    # Identity branch of the module.
    if cout == cin and not upsample:
        return x_nchw

    m = n * h * w
    tm = _pick_tile_m(m, tile_m)
    grid_m = m // tm
    itemsize = jnp.dtype(compute_dtype).itemsize

    # ---- layout glue (XLA): NCHW -> flattened NHWC rows ----
    x2d = jnp.transpose(x_nchw, (0, 2, 3, 1)).reshape(m, cin).astype(compute_dtype)
    w2d = conv_weight.reshape(cout, cin).T.astype(jnp.float32)      # (Cin, Cout)
    w_raw = w2d.astype(compute_dtype)

    # ---- pass 1: training-mode BN batch statistics of y = x @ w ----
    ysum, ysq = pl.pallas_call(
        _stats_kernel,
        out_shape=(jax.ShapeDtypeStruct((1, cout), jnp.float32),
                   jax.ShapeDtypeStruct((1, cout), jnp.float32)),
        grid=(grid_m,),
        in_specs=[pl.BlockSpec((tm, cin), lambda i: (i, 0)),
                  pl.BlockSpec((cin, cout), lambda i: (0, 0))],
        out_specs=(pl.BlockSpec((1, cout), lambda i: (0, 0)),
                   pl.BlockSpec((1, cout), lambda i: (0, 0))),
        compiler_params=pltpu.CompilerParams(
            dimension_semantics=("arbitrary",),
            vmem_limit_bytes=_vmem_limit(tm * cin * itemsize)),
    )(x2d, w_raw)

    # ---- fold BN (biased batch stats, eps=1e-3) into the conv weights ----
    mean_y = ysum[0] / m                                            # (Cout,)
    var_y = ysq[0] / m - mean_y * mean_y
    scale = bn_gamma.astype(jnp.float32) * lax.rsqrt(var_y + BN_EPS)
    bias = bn_beta.astype(jnp.float32) - mean_y * scale
    w_folded = (w2d * scale[None, :]).astype(compute_dtype)         # (Cin, Cout)
    bias2d = bias.reshape(1, cout)

    if upsample and pool_indices_nchw is not None:
        # ---- pass 2a: matmul + affine + MaxUnpool2d(2, stride=2) ----
        out_w = 2 * w
        idx2d = jnp.transpose(pool_indices_nchw, (0, 2, 3, 1)) \
                   .reshape(m, cout).astype(jnp.int32)
        tile_bytes = tm * (cin * itemsize + cout * 4 + 4 * cout * 4)
        quad = pl.pallas_call(
            functools.partial(_unpool_kernel, w_in=w, h_in=h, out_w=out_w),
            out_shape=jax.ShapeDtypeStruct((m, 4 * cout), jnp.float32),
            grid=(grid_m,),
            in_specs=[pl.BlockSpec((tm, cin), lambda i: (i, 0)),
                      pl.BlockSpec((tm, cout), lambda i: (i, 0)),
                      pl.BlockSpec((cin, cout), lambda i: (0, 0)),
                      pl.BlockSpec((1, cout), lambda i: (0, 0))],
            out_specs=pl.BlockSpec((tm, 4 * cout), lambda i: (i, 0)),
            compiler_params=pltpu.CompilerParams(
                dimension_semantics=("parallel",),
                vmem_limit_bytes=_vmem_limit(tile_bytes)),
        )(x2d, idx2d, w_folded, bias2d)

        # (M, 4*Cout) is bit-identical to (N, H, W, 2, 2, Cout); one XLA
        # transpose yields the NCHW layout PyTorch returns.
        o = quad.reshape(n, h, w, 2, 2, cout)           # (n, h, w, dr, dc, c)
        o = jnp.transpose(o, (0, 5, 1, 3, 2, 4))        # (n, c, h, dr, w, dc)
        return o.reshape(n, cout, 2 * h, 2 * w)

    # ---- pass 2b: conv + BN only (upsample=False or no pooling module) ----
    tile_bytes = tm * (cin * itemsize + cout * 4)
    y2d = pl.pallas_call(
        _affine_kernel,
        out_shape=jax.ShapeDtypeStruct((m, cout), jnp.float32),
        grid=(grid_m,),
        in_specs=[pl.BlockSpec((tm, cin), lambda i: (i, 0)),
                  pl.BlockSpec((cin, cout), lambda i: (0, 0)),
                  pl.BlockSpec((1, cout), lambda i: (0, 0))],
        out_specs=pl.BlockSpec((tm, cout), lambda i: (i, 0)),
        compiler_params=pltpu.CompilerParams(
            dimension_semantics=("parallel",),
            vmem_limit_bytes=_vmem_limit(tile_bytes)),
    )(x2d, w_folded, bias2d)
    o = y2d.reshape(n, h, w, cout)
    return jnp.transpose(o, (0, 3, 1, 2))


# ---------------------- pure-JAX references for validation -------------------
def _reference_convbn(x_nchw, conv_weight, gamma, beta):
    y = lax.conv_general_dilated(
        x_nchw, conv_weight, (1, 1), "VALID",
        dimension_numbers=("NCHW", "OIHW", "NCHW"))
    mean = y.mean(axis=(0, 2, 3), keepdims=True)
    var = ((y - mean) ** 2).mean(axis=(0, 2, 3), keepdims=True)
    return (y - mean) / jnp.sqrt(var + BN_EPS) \
        * gamma.reshape(1, -1, 1, 1) + beta.reshape(1, -1, 1, 1)


def _reference(x_nchw, conv_weight, gamma, beta, idx_nchw):
    ybn = _reference_convbn(x_nchw, conv_weight, gamma, beta)
    nb, c, hh, ww = ybn.shape
    out = jnp.zeros((nb, c, 2 * hh * 2 * ww), ybn.dtype)
    flat_idx = idx_nchw.reshape(nb, c, hh * ww)
    vals = ybn.reshape(nb, c, hh * ww)
    out = out.at[jnp.arange(nb)[:, None, None],
                 jnp.arange(c)[None, :, None],
                 flat_idx].set(vals)
    return out.reshape(nb, c, 2 * hh, 2 * ww)


if __name__ == "__main__":
    key = jax.random.PRNGKey(0)
    k_x, k_w, k_g, k_b, k_r, k_c = jax.random.split(key, 6)

    # pooled spatial 16x16 -> unpooled 32x32 ; M = 2*16*16 = 512 rows
    N, CIN, COUT, H, W = 2, 8, 16, 16, 16

    x = jax.random.normal(k_x, (N, CIN, H, W), dtype=jnp.float32)
    conv_weight = jax.random.normal(k_w, (COUT, CIN, 1, 1), dtype=jnp.float32) * 0.5
    bn_gamma = jax.random.normal(k_g, (COUT,), dtype=jnp.float32) * 0.1 + 1.0
    bn_beta = jax.random.normal(k_b, (COUT,), dtype=jnp.float32) * 0.1

    # Synthetic MaxPool2d(2,2,return_indices=True) indices: for each pooled
    # position pick one of the 4 locations in its 2x2 block, flattened into the
    # (2H, 2W) plane — exactly what MaxUnpool2d expects.
    dr = jax.random.randint(k_r, (N, COUT, H, W), 0, 2, dtype=jnp.int32)
    dc = jax.random.randint(k_c, (N, COUT, H, W), 0, 2, dtype=jnp.int32)
    hh = jnp.arange(H, dtype=jnp.int32).reshape(1, 1, H, 1)
    ww = jnp.arange(W, dtype=jnp.int32).reshape(1, 1, 1, W)
    pool_indices = (2 * hh + dr) * (2 * W) + (2 * ww + dc)        # (N, COUT, H, W)

    # tile_m=128 -> 4 M-tiles: exercises the pipelined multi-tile path.
    out = decoder_other_path(x, conv_weight, bn_gamma, bn_beta,
                             pool_indices, upsample=True, tile_m=128)
    out = jax.block_until_ready(out)
    ref = _reference(x, conv_weight, bn_gamma, bn_beta, pool_indices)
    assert out.shape == (N, COUT, 2 * H, 2 * W), out.shape
    assert jnp.allclose(out, ref, atol=2e-3, rtol=2e-3), \
        float(jnp.max(jnp.abs(out - ref)))

    # conv + BN branch of the module (upsample=False, Cout != Cin).
    out2 = decoder_other_path(x, conv_weight, bn_gamma, bn_beta,
                              None, upsample=False, tile_m=128)
    out2 = jax.block_until_ready(out2)
    ref2 = _reference_convbn(x, conv_weight, bn_gamma, bn_beta)
    assert jnp.allclose(out2, ref2, atol=2e-3, rtol=2e-3), \
        float(jnp.max(jnp.abs(out2 - ref2)))

    print("KERNEL_OK")
</pallas_src>

<mosaic_0001>
module attributes {stable_mosaic.version = 11 : i64} {
  func.func @_stats_kernel(%arg0: i32, %arg1: memref<128x8xf32, #tpu.memory_space<vmem>>, %arg2: memref<8x16xf32, #tpu.memory_space<vmem>>, %arg3: memref<1x16xf32, #tpu.memory_space<vmem>>, %arg4: memref<1x16xf32, #tpu.memory_space<vmem>>) attributes {dimension_semantics = [#tpu.dimension_semantics<arbitrary>], iteration_bounds = array<i64: 4>, scalar_prefetch = 0 : i64, scratch_operands = 0 : i64, tpu.core_type = #tpu.core_type<tc>, window_params = [{transform_indices = @transform_0, window_bounds = array<i64: 128, 8>}, {pipeline_mode = #tpu.pipeline_mode<synchronous>, transform_indices = @transform_1, window_bounds = array<i64: 8, 16>}, {pipeline_mode = #tpu.pipeline_mode<synchronous>, transform_indices = @transform_2, window_bounds = array<i64: 1, 16>}, {pipeline_mode = #tpu.pipeline_mode<synchronous>, transform_indices = @transform_3, window_bounds = array<i64: 1, 16>}]} {
    %c0_i32 = arith.constant 0 : i32
    %0 = arith.cmpi eq, %arg0, %c0_i32 : i32
    %1 = arith.extui %0 : i1 to i32
    %c0_i32_0 = arith.constant 0 : i32
    %2 = arith.cmpi ne, %1, %c0_i32_0 : i32
    scf.if %2 {
      %cst_14 = arith.constant 0.000000e+00 : f32
      %17 = vector.broadcast %cst_14 : f32 to vector<1x16xf32>
      %c0_15 = arith.constant 0 : index
      %c0_16 = arith.constant 0 : index
      %18 = vector.load %arg3[%c0_15, %c0_16] : memref<1x16xf32, #tpu.memory_space<vmem>>, vector<1x16xf32>
      tpu.vector_store %arg3[%c0_15, %c0_16], %17 {strides = array<i32>} : memref<1x16xf32, #tpu.memory_space<vmem>>, vector<1x16xf32>,
      %cst_17 = arith.constant 0.000000e+00 : f32
      %19 = vector.broadcast %cst_17 : f32 to vector<1x16xf32>
      %c0_18 = arith.constant 0 : index
      %c0_19 = arith.constant 0 : index
      %20 = vector.load %arg4[%c0_18, %c0_19] : memref<1x16xf32, #tpu.memory_space<vmem>>, vector<1x16xf32>
      tpu.vector_store %arg4[%c0_18, %c0_19], %19 {strides = array<i32>} : memref<1x16xf32, #tpu.memory_space<vmem>>, vector<1x16xf32>,
    } else {
    }
    %c0 = arith.constant 0 : index
    %c0_1 = arith.constant 0 : index
    %3 = vector.load %arg1[%c0, %c0_1] : memref<128x8xf32, #tpu.memory_space<vmem>>, vector<128x8xf32>
    %c0_2 = arith.constant 0 : index
    %c0_3 = arith.constant 0 : index
    %4 = vector.load %arg2[%c0_2, %c0_3] : memref<8x16xf32, #tpu.memory_space<vmem>>, vector<8x16xf32>
    %cst = arith.constant dense<0.000000e+00> : vector<128x16xf32>
    %5 = tpu.matmul %3, %4, %cst {dimension_numbers = #tpu.dot_dimension_numbers<[1], [0], [0], [1], [0, 0, 1, 1], [], []>} : vector<128x8xf32>, vector<8x16xf32>, vector<128x16xf32> -> vector<128x16xf32>
    %c0_4 = arith.constant 0 : index
    %c0_5 = arith.constant 0 : index
    %6 = vector.load %arg3[%c0_4, %c0_5] : memref<1x16xf32, #tpu.memory_space<vmem>>, vector<1x16xf32>
    %cst_6 = arith.constant dense<0.000000e+00> : vector<16xf32>
    %7 = vector.multi_reduction <add>, %5, %cst_6 [0] : vector<128x16xf32> to vector<16xf32>
    %8 = vector.shape_cast %7 : vector<16xf32> to vector<1x16xf32>
    %9 = arith.addf %6, %8 : vector<1x16xf32>
    %c0_7 = arith.constant 0 : index
    %c0_8 = arith.constant 0 : index
    %10 = vector.load %arg3[%c0_7, %c0_8] : memref<1x16xf32, #tpu.memory_space<vmem>>, vector<1x16xf32>
    tpu.vector_store %arg3[%c0_7, %c0_8], %9 {strides = array<i32>} : memref<1x16xf32, #tpu.memory_space<vmem>>, vector<1x16xf32>,
    %c0_9 = arith.constant 0 : index
    %c0_10 = arith.constant 0 : index
    %11 = vector.load %arg4[%c0_9, %c0_10] : memref<1x16xf32, #tpu.memory_space<vmem>>, vector<1x16xf32>
    %12 = arith.mulf %5, %5 : vector<128x16xf32>
    %cst_11 = arith.constant dense<0.000000e+00> : vector<16xf32>
    %13 = vector.multi_reduction <add>, %12, %cst_11 [0] : vector<128x16xf32> to vector<16xf32>
    %14 = vector.shape_cast %13 : vector<16xf32> to vector<1x16xf32>
    %15 = arith.addf %11, %14 : vector<1x16xf32>
    %c0_12 = arith.constant 0 : index
    %c0_13 = arith.constant 0 : index
    %16 = vector.load %arg4[%c0_12, %c0_13] : memref<1x16xf32, #tpu.memory_space<vmem>>, vector<1x16xf32>
    tpu.vector_store %arg4[%c0_12, %c0_13], %15 {strides = array<i32>} : memref<1x16xf32, #tpu.memory_space<vmem>>, vector<1x16xf32>,
    return
  }
  func.func @transform_0(%arg0: i32) -> (i32, i32) {
    %c0_i32 = arith.constant 0 : i32
    %c0_i32_0 = arith.constant 0 : i32
    return %arg0, %c0_i32 : i32, i32
  }
  func.func @transform_1(%arg0: i32) -> (i32, i32) {
    %c0_i32 = arith.constant 0 : i32
    %c0_i32_0 = arith.constant 0 : i32
    %c0_i32_1 = arith.constant 0 : i32
    return %c0_i32, %c0_i32_0 : i32, i32
  }
  func.func @transform_2(%arg0: i32) -> (i32, i32) {
    %c0_i32 = arith.constant 0 : i32
    %c0_i32_0 = arith.constant 0 : i32
    %c0_i32_1 = arith.constant 0 : i32
    return %c0_i32, %c0_i32_0 : i32, i32
  }
  func.func @transform_3(%arg0: i32) -> (i32, i32) {
    %c0_i32 = arith.constant 0 : i32
    %c0_i32_0 = arith.constant 0 : i32
    %c0_i32_1 = arith.constant 0 : i32
    return %c0_i32, %c0_i32_0 : i32, i32
  }
}

</mosaic_0001>

<llo_original>
// kernel: tpu_custom_call.1
$region0: #{tpu_custom_call.1}
  #allocation0 [shape = 'u32[]', space=smem, size = 0x4, offset = 0x4, fixed_abs, tag = 'smem constant byte address 0x4 - core index']
  #allocation1 [shape = 'u32[144,128]{1,0:T(1,128)}', space=vmem, size = 0x12000, scoped, tag = 'internal scratch']
  %s0 = inlined_call_operand.vmem [shape: f32[512,8], index: 0, kind: input, shape index: {}]
  %s1 = inlined_call_operand.vmem [shape: f32[8,16], index: 1, kind: input, shape index: {}]
  %s2 = inlined_call_operand.hbm [shape: f32[1,16], index: 2, kind: output, shape index: {0}]
  %s3 = inlined_call_operand.hbm [shape: f32[1,16], index: 3, kind: output, shape index: {1}]
  %4 = xla_tuple %s2, %s3
  %s5 = sld [smem:[#allocation0]]
  $region53: #{tpu_custom_call.1} parent=0
    _
  %s7 = ssub.s32 1, %s5
  %s8 = scalar_select 0, %s7, %s5
  $region1: #{tpu_custom_call.1} parent=0
    #allocation2 [shape = 'u8[512]{0}', space=vmem, size = 0x400, scoped, tag = 'output window, operand 0, single buffered']
    #allocation3 [shape = 's32[2]{0}', space=sflag, size = 0x8, scoped, tag = 'scoped memory for tpu_custom_call.1']
    #allocation4 [shape = 'u8[512]{0}', space=vmem, size = 0x400, scoped, tag = 'output window, operand 1, single buffered']
    #allocation5 [shape = 's32[1]{0}', space=sflag, size = 0x4, scoped, tag = 'scoped memory for tpu_custom_call.1']
    %9 = vsyncpa [#allocation3], 0
    %10 = vsyncpa [#allocation5], 0
    loop: start=0, step=1, limit=6
    $region2: #{tpu_custom_call.1} parent=1 // loop_pre_header
      _
    $region3: #{tpu_custom_call.1} parent=1 // loop_header
      %s12 = sphi 0, %s16
      %p13 = scmp.ge.s32.totalorder %s12, 6
      %s22 = sphi 0, %s24
      %s25 = sphi 0, %s22
      %s26 = sphi 0, %s25
      %s42 = sphi 0, %s26
      %s46 = sphi 0, %s46
      %s48 = sphi 0, %s46
      %s49 = sphi 0, %s48
      %s63 = sphi 0, %s49
      %s67 = sphi 0, %s67
      %s69 = sphi 0, %s67
      %s70 = sphi 0, %s69
      %s84 = sphi 0, %s70
      %s88 = sphi 0, %s88
      %s90 = sphi 0, %s88
      %s91 = sphi 0, %s90
      %s105 = sphi 0, %s91
    $region4: #{tpu_custom_call.1} parent=1 // loop_header_branch
      %15 = sbr.rel (%p13) target = $region8
    $region5: #{tpu_custom_call.1} parent=1 // loop_body
      %s17 = ssub.s32 %s12, 1
      %s18 = ssub.s32 %s12, 2
      %s19 = sadd.s32 %s12, 1
      %s20 = ssub.s32 %s12, %s19
      %p21 = scmp.eq.s32.totalorder %s20, 0
      %s23 = sadd.s32 %s22, 1
      %s24 = scalar_select %p21, %s22, %s23
      %p27 = pneg %p21
      %p28 = scmp.eq.s32.totalorder %s12, 3
      %p29 = por %p27, %p28
      %p30 = scmp.ne.s32.totalorder %s22, %s25
      %p31 = scmp.eq.s32.totalorder %s12, 0
      %p32 = por %p30, %p31
      %p33 = scmp.ne.s32.totalorder %s22, %s25
      %p34 = scmp.eq.s32.totalorder %s17, 3
      %p35 = por %p33, %p34
      %p36 = scmp.ne.s32.totalorder %s25, %s26
      %p37 = scmp.eq.s32.totalorder %s17, 0
      %p38 = por %p36, %p37
      %p39 = scmp.ne.s32.totalorder %s25, %s26
      %p40 = scmp.eq.s32.totalorder %s18, 3
      %p41 = por %p39, %p40
      %p43 = scmp.ne.s32.totalorder %s26, %s42
      %p44 = scmp.eq.s32.totalorder %s18, 0
      %p45 = por %p43, %p44
      %s47 = sadd.s32 %s46, 1
      %p50 = scmp.eq.s32.totalorder %s12, 3
      %p51 = scmp.ne.s32.totalorder %s46, %s48
      %p52 = scmp.eq.s32.totalorder %s12, 0
      %p53 = por %p51, %p52
      %p54 = scmp.ne.s32.totalorder %s46, %s48
      %p55 = scmp.eq.s32.totalorder %s17, 3
      %p56 = por %p54, %p55
      %p57 = scmp.ne.s32.totalorder %s48, %s49
      %p58 = scmp.eq.s32.totalorder %s17, 0
      %p59 = por %p57, %p58
      %p60 = scmp.ne.s32.totalorder %s48, %s49
      %p61 = scmp.eq.s32.totalorder %s18, 3
      %p62 = por %p60, %p61
      %p64 = scmp.ne.s32.totalorder %s49, %s63
      %p65 = scmp.eq.s32.totalorder %s18, 0
      %p66 = por %p64, %p65
      %s68 = sadd.s32 %s67, 1
      %p71 = scmp.eq.s32.totalorder %s12, 3
      %p72 = scmp.ne.s32.totalorder %s67, %s69
      %p73 = scmp.eq.s32.totalorder %s12, 0
      %p74 = por %p72, %p73
      %p75 = scmp.ne.s32.totalorder %s67, %s69
      %p76 = scmp.eq.s32.totalorder %s17, 3
      %p77 = por %p75, %p76
      %p78 = scmp.ne.s32.totalorder %s69, %s70
      %p79 = scmp.eq.s32.totalorder %s17, 0
      %p80 = por %p78, %p79
      %p81 = scmp.ne.s32.totalorder %s69, %s70
      %p82 = scmp.eq.s32.totalorder %s18, 3
      %p83 = por %p81, %p82
      %p85 = scmp.ne.s32.totalorder %s70, %s84
      %p86 = scmp.eq.s32.totalorder %s18, 0
      %p87 = por %p85, %p86
      %s89 = sadd.s32 %s88, 1
      %p92 = scmp.eq.s32.totalorder %s12, 3
      %p93 = scmp.ne.s32.totalorder %s88, %s90
      %p94 = scmp.eq.s32.totalorder %s12, 0
      %p95 = por %p93, %p94
      %p96 = scmp.ne.s32.totalorder %s88, %s90
      %p97 = scmp.eq.s32.totalorder %s17, 3
      %p98 = por %p96, %p97
      %p99 = scmp.ne.s32.totalorder %s90, %s91
      %p100 = scmp.eq.s32.totalorder %s17, 0
      %p101 = por %p99, %p100
      %p102 = scmp.ne.s32.totalorder %s90, %s91
      %p103 = scmp.eq.s32.totalorder %s18, 3
      %p104 = por %p102, %p103
      %p106 = scmp.ne.s32.totalorder %s91, %s105
      %p107 = scmp.eq.s32.totalorder %s18, 0
      %p108 = por %p106, %p107
      %p109 = scmp.le.s32.totalorder 1, %s12
      %p110 = scmp.lt.s32.totalorder %s12, 5
      %p111 = pnand %p109, %p110
      %p112 = pneg %p111
      // Predicated region
      $region9: #{tpu_custom_call.1} parent=5 // pred_check
        _
      $region10: #{tpu_custom_call.1} parent=5 // pred_check_branch
        %114 = sbr.rel (%p111) target = $region12
      $region11: #{tpu_custom_call.1} parent=5 // pred_region
        %s115 = ssub.s32 %s12, 1
        // Predicated region
        $region13: #{tpu_custom_call.1} parent=11 // pred_check
          %p116 = pneg %p59
        $region14: #{tpu_custom_call.1} parent=11 // pred_check_branch
          %118 = sbr.rel (%p116) target = $region16
        $region15: #{tpu_custom_call.1} parent=11 // pred_region
          _
        $region16: #{tpu_custom_call.1} parent=11 // pred_fallthru
          _
      $region12: #{tpu_custom_call.1} parent=5 // pred_fallthru
        _
      %p119 = scmp.lt.s32.totalorder %s12, 4
      // Predicated region
      $region17: #{tpu_custom_call.1} parent=5 // pred_check
        %p120 = pneg %p119
      $region18: #{tpu_custom_call.1} parent=5 // pred_check_branch
        %122 = sbr.rel (%p120) target = $region20
      $region19: #{tpu_custom_call.1} parent=5 // pred_region
        // Predicated region
        $region21: #{tpu_custom_call.1} parent=19 // pred_check
          %p123 = pneg %p32
        $region22: #{tpu_custom_call.1} parent=19 // pred_check_branch
          %125 = sbr.rel (%p123) target = $region24
        $region23: #{tpu_custom_call.1} parent=19 // pred_region
          %s126 = smul.u32 16, %s12
          %p127 = scmp.lt.s32.totalorder %s126, 63
          %s128 = scalar_select %p127, %s126, 63
          %s129 = smul.addr %s128, 8
          %s130 = scalar_lea.vmem %s0, %s129
          %s131 = smul.u32 16, %s12
        $region24: #{tpu_custom_call.1} parent=19 // pred_fallthru
          _
      $region20: #{tpu_custom_call.1} parent=5 // pred_fallthru
        _
      %p132 = scmp.le.s32.totalorder 1, %s12
      %p133 = scmp.lt.s32.totalorder %s12, 5
      %p134 = pnand %p132, %p133
      %p135 = pneg %p134
      // Predicated region
      $region25: #{tpu_custom_call.1} parent=5 // pred_check
        _
      $region26: #{tpu_custom_call.1} parent=5 // pred_check_branch
        %137 = sbr.rel (%p134) target = $region28
      $region27: #{tpu_custom_call.1} parent=5 // pred_region
        %s138 = ssub.s32 %s12, 1
        %s139 = smul.u32 16, %s17
        %p140 = scmp.lt.s32.totalorder %s139, 63
        %s141 = scalar_select %p140, %s139, 63
        %s142 = smul.addr %s141, 8
        %s143 = scalar_lea.vmem %s0, %s142
        %p144 = pneg %p38
        %p145 = pneg %p35
        %p146 = pneg %p59
        %p147 = pneg %p56
        %p148 = pneg %p80
        %p149 = pneg %p77
        %p150 = pneg %p101
        %p151 = pneg %p98
        %s152 = smul.u32 16, %s17
        %p153 = scmp.lt.s32.totalorder %s152, 63
        %s154 = scalar_select %p153, %s152, 63
        %s155 = smul.addr %s154, 8
        %s156 = scalar_lea.vmem %s0, %s155
        %s157 = smul.u32 16, %s17
        %p158 = scmp.eq.s32.totalorder %s17, 0
        // Predicated region
        $region29: #{tpu_custom_call.1} parent=27 // pred_check
          %p159 = pneg %p158
        $region30: #{tpu_custom_call.1} parent=27 // pred_check_branch
          %161 = sbr.rel (%p159) target = $region32
        $region31: #{tpu_custom_call.1} parent=27 // pred_region
          %vm162 = vcmask 122880
          %163 = vst.msk [vmem:[#allocation2] sm:$0x1] %vm162, 0.0
          %164 = vst.msk [vmem:[#allocation4] sm:$0x1] %vm162, 0.0
        $region32: #{tpu_custom_call.1} parent=27 // pred_fallthru
          _
        %v165 = vld [vmem:[%s156] sm:$0xff]
        %v166 = vld [vmem:[%s156 + $0x8] sm:$0xff]
        %v167 = vld [vmem:[%s156 + $0x10] sm:$0xff]
        %v168 = vld [vmem:[%s156 + $0x18] sm:$0xff]
        %v169 = vld [vmem:[%s156 + $0x20] sm:$0xff]
        %v170 = vld [vmem:[%s156 + $0x28] sm:$0xff]
        %v171 = vld [vmem:[%s156 + $0x30] sm:$0xff]
        %v172 = vld [vmem:[%s156 + $0x38] sm:$0xff]
        %v173 = vld [vmem:[%s156 + $0x40] sm:$0xff]
        %v174 = vld [vmem:[%s156 + $0x48] sm:$0xff]
        %v175 = vld [vmem:[%s156 + $0x50] sm:$0xff]
        %v176 = vld [vmem:[%s156 + $0x58] sm:$0xff]
        %v177 = vld [vmem:[%s156 + $0x60] sm:$0xff]
        %v178 = vld [vmem:[%s156 + $0x68] sm:$0xff]
        %v179 = vld [vmem:[%s156 + $0x70] sm:$0xff]
        %v180 = vld [vmem:[%s156 + $0x78] sm:$0xff]
        %v181 = vld [vmem:[%s1] sm:$0xff]
        %vm182 = vcmask 64512
        %v184 = vsel %vm182, %v165, 0
        %v187 = vsel %vm182, %v166, 0
        %v190 = vsel %vm182, %v167, 0
        %v193 = vsel %vm182, %v168, 0
        %v196 = vsel %vm182, %v169, 0
        %v199 = vsel %vm182, %v170, 0
        %v202 = vsel %vm182, %v171, 0
        %v205 = vsel %vm182, %v172, 0
        %v208 = vsel %vm182, %v173, 0
        %v211 = vsel %vm182, %v174, 0
        %v214 = vsel %vm182, %v175, 0
        %v217 = vsel %vm182, %v176, 0
        %v220 = vsel %vm182, %v177, 0
        %v223 = vsel %vm182, %v178, 0
        %v226 = vsel %vm182, %v179, 0
        %v229 = vsel %vm182, %v180, 0
        %231 = vmatprep.subr.mxu0 0.0
        %232 = vmatpush1.msra.mxu0 %v181
        %233 = vmatprep.subr.mxu0 0.0
        %234 = vmatpush1.msra.mxu0 0.0
        %235 = vmatprep.subr.mxu0 0.0
        %236 = vmatpush1.msra.mxu0 0.0
        %237 = vmatprep.subr.mxu0 0.0
        %238 = vmatpush1.msra.mxu0 0.0
        %239 = vmatprep.subr.mxu0 0.0
        %240 = vmatpush1.msra.mxu0 0.0
        %241 = vmatprep.subr.mxu0 0.0
        %242 = vmatpush1.msra.mxu0 0.0
        %243 = vmatprep.subr.mxu0 0.0
        %244 = vmatpush1.msra.mxu0 0.0
        %245 = vmatprep.subr.mxu0 0.0
        %246 = vmatpush1.msra.mxu0 0.0
        %247 = vmatprep.subr.mxu0 0.0
        %248 = vmatpush1.msra.mxu0 0.0
        %249 = vmatprep.subr.mxu0 0.0
        %250 = vmatpush1.msra.mxu0 0.0
        %251 = vmatprep.subr.mxu0 0.0
        %252 = vmatpush1.msra.mxu0 0.0
        %253 = vmatprep.subr.mxu0 0.0
        %254 = vmatpush1.msra.mxu0 0.0
        %255 = vmatprep.subr.mxu0 0.0
        %256 = vmatpush1.msra.mxu0 0.0
        %257 = vmatprep.subr.mxu0 0.0
        %258 = vmatpush1.msra.mxu0 0.0
        %259 = vmatprep.subr.mxu0 0.0
        %260 = vmatpush1.msra.mxu0 0.0
        %261 = vmatprep.subr.mxu0 0.0
        %262 = vmatpush1.msra.mxu0 0.0
        %263 = vmatprep.subr.mxu0 0.0
        %264 = vmatpush1.msra.mxu0 0.0
        %265 = vmatprep.subr.mxu0 0.0
        %266 = vmatpush1.msra.mxu0 0.0
        %267 = vmatprep.subr.mxu0 0.0
        %268 = vmatpush1.msra.mxu0 0.0
        %269 = vmatprep.subr.mxu0 0.0
        %270 = vmatpush1.msra.mxu0 0.0
        %271 = vmatprep.subr.mxu0 0.0
        %272 = vmatpush1.msra.mxu0 0.0
        %273 = vmatprep.subr.mxu0 0.0
        %274 = vmatpush1.msra.mxu0 0.0
        %275 = vmatprep.subr.mxu0 0.0
        %276 = vmatpush1.msra.mxu0 0.0
        %277 = vmatprep.subr.mxu0 0.0
        %278 = vmatpush1.msra.mxu0 0.0
        %279 = vmatprep.subr.mxu0 0.0
        %280 = vmatpush1.msra.mxu0 0.0
        %281 = vmatprep.subr.mxu0 0.0
        %282 = vmatpush1.msra.mxu0 0.0
        %283 = vmatprep.subr.mxu0 0.0
        %284 = vmatpush1.msra.mxu0 0.0
        %285 = vmatprep.subr.mxu0 0.0
        %286 = vmatpush1.msra.mxu0 0.0
        %287 = vmatprep.subr.mxu0 0.0
        %288 = vmatpush1.msra.mxu0 0.0
        %289 = vmatprep.subr.mxu0 0.0
        %290 = vmatpush1.msra.mxu0 0.0
        %291 = vmatprep.subr.mxu0 0.0
        %292 = vmatpush1.msra.mxu0 0.0
        %293 = vmatprep.subr.mxu0 0.0
        %294 = vmatpush1.msra.mxu0 0.0
        %295 = vmatprep.mubr.f32.mxu0 0.0
        %296 = vmatmul.mubr.f32.gmra.mrb[0].mxu0 %v184
        %v297 = vpop.f32.mrb[0].mxu0
        %v298 = vadd.f32 0.0, %v297
        %v299 = vpop.f32.mrb[0].mxu0
        %300 = vmatprep.mubr.f32.mxu0 0.0
        %301 = vmatmul.mubr.f32.gmra.mrb[0].mxu0 %v187
        %v302 = vpop.f32.mrb[0].mxu0
        %v303 = vadd.f32 0.0, %v302
        %v304 = vpop.f32.mrb[0].mxu0
        %305 = vmatprep.mubr.f32.mxu0 0.0
        %306 = vmatmul.mubr.f32.gmra.mrb[0].mxu0 %v190
        %v307 = vpop.f32.mrb[0].mxu0
        %v308 = vadd.f32 0.0, %v307
        %v309 = vpop.f32.mrb[0].mxu0
        %310 = vmatprep.mubr.f32.mxu0 0.0
        %311 = vmatmul.mubr.f32.gmra.mrb[0].mxu0 %v193
        %v312 = vpop.f32.mrb[0].mxu0
        %v313 = vadd.f32 0.0, %v312
        %v314 = vpop.f32.mrb[0].mxu0
        %315 = vmatprep.mubr.f32.mxu0 0.0
        %316 = vmatmul.mubr.f32.gmra.mrb[0].mxu0 %v196
        %v317 = vpop.f32.mrb[0].mxu0
        %v318 = vadd.f32 0.0, %v317
        %v319 = vpop.f32.mrb[0].mxu0
        %320 = vmatprep.mubr.f32.mxu0 0.0
        %321 = vmatmul.mubr.f32.gmra.mrb[0].mxu0 %v199
        %v322 = vpop.f32.mrb[0].mxu0
        %v323 = vadd.f32 0.0, %v322
        %v324 = vpop.f32.mrb[0].mxu0
        %325 = vmatprep.mubr.f32.mxu0 0.0
        %326 = vmatmul.mubr.f32.gmra.mrb[0].mxu0 %v202
        %v327 = vpop.f32.mrb[0].mxu0
        %v328 = vadd.f32 0.0, %v327
        %v329 = vpop.f32.mrb[0].mxu0
        %330 = vmatprep.mubr.f32.mxu0 0.0
        %331 = vmatmul.mubr.f32.gmra.mrb[0].mxu0 %v205
        %v332 = vpop.f32.mrb[0].mxu0
        %v333 = vadd.f32 0.0, %v332
        %v334 = vpop.f32.mrb[0].mxu0
        %335 = vmatprep.mubr.f32.mxu0 0.0
        %336 = vmatmul.mubr.f32.gmra.mrb[0].mxu0 %v208
        %v337 = vpop.f32.mrb[0].mxu0
        %v338 = vadd.f32 0.0, %v337
        %v339 = vpop.f32.mrb[0].mxu0
        %340 = vmatprep.mubr.f32.mxu0 0.0
        %341 = vmatmul.mubr.f32.gmra.mrb[0].mxu0 %v211
        %v342 = vpop.f32.mrb[0].mxu0
        %v343 = vadd.f32 0.0, %v342
        %v344 = vpop.f32.mrb[0].mxu0
        %345 = vmatprep.mubr.f32.mxu0 0.0
        %346 = vmatmul.mubr.f32.gmra.mrb[0].mxu0 %v214
        %v347 = vpop.f32.mrb[0].mxu0
        %v348 = vadd.f32 0.0, %v347
        %v349 = vpop.f32.mrb[0].mxu0
        %350 = vmatprep.mubr.f32.mxu0 0.0
        %351 = vmatmul.mubr.f32.gmra.mrb[0].mxu0 %v217
        %v352 = vpop.f32.mrb[0].mxu0
        %v353 = vadd.f32 0.0, %v352
        %v354 = vpop.f32.mrb[0].mxu0
        %355 = vmatprep.mubr.f32.mxu0 0.0
        %356 = vmatmul.mubr.f32.gmra.mrb[0].mxu0 %v220
        %v357 = vpop.f32.mrb[0].mxu0
        %v358 = vadd.f32 0.0, %v357
        %v359 = vpop.f32.mrb[0].mxu0
        %360 = vmatprep.mubr.f32.mxu0 0.0
        %361 = vmatmul.mubr.f32.gmra.mrb[0].mxu0 %v223
        %v362 = vpop.f32.mrb[0].mxu0
        %v363 = vadd.f32 0.0, %v362
        %v364 = vpop.f32.mrb[0].mxu0
        %365 = vmatprep.mubr.f32.mxu0 0.0
        %366 = vmatmul.mubr.f32.gmra.mrb[0].mxu0 %v226
        %v367 = vpop.f32.mrb[0].mxu0
        %v368 = vadd.f32 0.0, %v367
        %v369 = vpop.f32.mrb[0].mxu0
        %370 = vmatprep.mubr.f32.mxu0 0.0
        %371 = vmatmul.mubr.f32.gmra.mrb[0].mxu0 %v229
        %v372 = vpop.f32.mrb[0].mxu0
        %v373 = vadd.f32 0.0, %v372
        %v374 = vpop.f32.mrb[0].mxu0
        %375 = vdwg.mxu0
        %v376 = vld [vmem:[#allocation2] sm:$0x1]
        %vm377 = vcmask 130048
        %v378 = vsel %vm377, %v298, 0.0
        %v379 = vsel %vm377, %v303, 0.0
        %v380 = vadd.f32 %v378, %v379
        %v381 = vsel %vm377, %v308, 0.0
        %v382 = vadd.f32 %v380, %v381
        %v383 = vsel %vm377, %v313, 0.0
        %v384 = vadd.f32 %v382, %v383
        %v385 = vsel %vm377, %v318, 0.0
        %v386 = vadd.f32 %v384, %v385
        %v387 = vsel %vm377, %v323, 0.0
        %v388 = vadd.f32 %v386, %v387
        %v389 = vsel %vm377, %v328, 0.0
        %v390 = vadd.f32 %v388, %v389
        %v391 = vsel %vm377, %v333, 0.0
        %v392 = vadd.f32 %v390, %v391
        %v393 = vsel %vm377, %v338, 0.0
        %v394 = vadd.f32 %v392, %v393
        %v395 = vsel %vm377, %v343, 0.0
        %v396 = vadd.f32 %v394, %v395
        %v397 = vsel %vm377, %v348, 0.0
        %v398 = vadd.f32 %v396, %v397
        %v399 = vsel %vm377, %v353, 0.0
        %v400 = vadd.f32 %v398, %v399
        %v401 = vsel %vm377, %v358, 0.0
        %v402 = vadd.f32 %v400, %v401
        %v403 = vsel %vm377, %v363, 0.0
        %v404 = vadd.f32 %v402, %v403
        %v405 = vsel %vm377, %v368, 0.0
        %v406 = vadd.f32 %v404, %v405
        %v407 = vsel %vm377, %v373, 0.0
        %v408 = vadd.f32 %v406, %v407
        %v409 = vrot.slane %v408, 4
        %v410 = vadd.f32 %v408, %v409
        %v411 = vrot.slane %v410, 2
        %v412 = vadd.f32 %v410, %v411
        %v413 = vrot.slane %v412, 1
        %v414 = vadd.f32 %v412, %v413
        %v415 = vadd.f32 %v376, %v414
        %vm416 = vcmask 122880
        %417 = vst.msk [vmem:[#allocation2] sm:$0x1] %vm416, %v415
        %v418 = vld [vmem:[#allocation4] sm:$0x1]
        %v419 = vmul.f32 %v298, %v298
        %v420 = vmul.f32 %v303, %v303
        %v421 = vmul.f32 %v308, %v308
        %v422 = vmul.f32 %v313, %v313
        %v423 = vmul.f32 %v318, %v318
        %v424 = vmul.f32 %v323, %v323
        %v425 = vmul.f32 %v328, %v328
        %v426 = vmul.f32 %v333, %v333
        %v427 = vmul.f32 %v338, %v338
        %v428 = vmul.f32 %v343, %v343
        %v429 = vmul.f32 %v348, %v348
        %v430 = vmul.f32 %v353, %v353
        %v431 = vmul.f32 %v358, %v358
        %v432 = vmul.f32 %v363, %v363
        %v433 = vmul.f32 %v368, %v368
        %v434 = vmul.f32 %v373, %v373
        %v435 = vsel %vm377, %v419, 0.0
        %v436 = vsel %vm377, %v420, 0.0
        %v437 = vadd.f32 %v435, %v436
        %v438 = vsel %vm377, %v421, 0.0
        %v439 = vadd.f32 %v437, %v438
        %v440 = vsel %vm377, %v422, 0.0
        %v441 = vadd.f32 %v439, %v440
        %v442 = vsel %vm377, %v423, 0.0
        %v443 = vadd.f32 %v441, %v442
        %v444 = vsel %vm377, %v424, 0.0
        %v445 = vadd.f32 %v443, %v444
        %v446 = vsel %vm377, %v425, 0.0
        %v447 = vadd.f32 %v445, %v446
        %v448 = vsel %vm377, %v426, 0.0
        %v449 = vadd.f32 %v447, %v448
        %v450 = vsel %vm377, %v427, 0.0
        %v451 = vadd.f32 %v449, %v450
        %v452 = vsel %vm377, %v428, 0.0
        %v453 = vadd.f32 %v451, %v452
        %v454 = vsel %vm377, %v429, 0.0
        %v455 = vadd.f32 %v453, %v454
        %v456 = vsel %vm377, %v430, 0.0
        %v457 = vadd.f32 %v455, %v456
        %v458 = vsel %vm377, %v431, 0.0
        %v459 = vadd.f32 %v457, %v458
        %v460 = vsel %vm377, %v432, 0.0
        %v461 = vadd.f32 %v459, %v460
        %v462 = vsel %vm377, %v433, 0.0
        %v463 = vadd.f32 %v461, %v462
        %v464 = vsel %vm377, %v434, 0.0
        %v465 = vadd.f32 %v463, %v464
        %v466 = vrot.slane %v465, 4
        %v467 = vadd.f32 %v465, %v466
        %v468 = vrot.slane %v467, 2
        %v469 = vadd.f32 %v467, %v468
        %v470 = vrot.slane %v469, 1
        %v471 = vadd.f32 %v469, %v470
        %v472 = vadd.f32 %v418, %v471
        %473 = vst.msk [vmem:[#allocation4] sm:$0x1] %vm416, %v472
        // Predicated region
        $region33: #{tpu_custom_call.1} parent=27 // pred_check
          %p474 = pneg %p77
        $region34: #{tpu_custom_call.1} parent=27 // pred_check_branch
          %476 = sbr.rel (%p474) target = $region36
        $region35: #{tpu_custom_call.1} parent=27 // pred_region
          %s478 = ssub.s32 16, 16
          %479 = vsyncadd [#allocation3], %s478
          %s481 = sshll.u32 [#allocation2], 4
          %s482 = int_to_ptr.vmem [resolvable:$true] %s481
          %484 = dma.vmem_to_hbm [thread:$0]  %s482, 16, %s2, [#allocation3]
        $region36: #{tpu_custom_call.1} parent=27 // pred_fallthru
          _
        // Predicated region
        $region37: #{tpu_custom_call.1} parent=27 // pred_check
          %p485 = pneg %p98
        $region38: #{tpu_custom_call.1} parent=27 // pred_check_branch
          %487 = sbr.rel (%p485) target = $region40
        $region39: #{tpu_custom_call.1} parent=27 // pred_region
          %s489 = ssub.s32 16, 16
          %490 = vsyncadd [#allocation5], %s489
          %s492 = sshll.u32 [#allocation4], 4
          %s493 = int_to_ptr.vmem [resolvable:$true] %s492
          %495 = dma.vmem_to_hbm [thread:$0]  %s493, 16, %s3, [#allocation5]
        $region40: #{tpu_custom_call.1} parent=27 // pred_fallthru
          _
        // Predicated region
        $region41: #{tpu_custom_call.1} parent=27 // pred_check
          %p496 = pneg %p77
        $region42: #{tpu_custom_call.1} parent=27 // pred_check_branch
          %498 = sbr.rel (%p496) target = $region44
        $region43: #{tpu_custom_call.1} parent=27 // pred_region
          %499 = dma.done [#allocation3], 16
        $region44: #{tpu_custom_call.1} parent=27 // pred_fallthru
          _
        // Predicated region
        $region45: #{tpu_custom_call.1} parent=27 // pred_check
          %p500 = pneg %p98
        $region46: #{tpu_custom_call.1} parent=27 // pred_check_branch
          %502 = sbr.rel (%p500) target = $region48
        $region47: #{tpu_custom_call.1} parent=27 // pred_region
          %503 = dma.done [#allocation5], 16
        $region48: #{tpu_custom_call.1} parent=27 // pred_fallthru
          _
      $region28: #{tpu_custom_call.1} parent=5 // pred_fallthru
        _
      %p504 = scmp.le.s32.totalorder 2, %s12
      // Predicated region
      $region49: #{tpu_custom_call.1} parent=5 // pred_check
        %p505 = pneg %p504
      $region50: #{tpu_custom_call.1} parent=5 // pred_check_branch
        %507 = sbr.rel (%p505) target = $region52
      $region51: #{tpu_custom_call.1} parent=5 // pred_region
        %s508 = ssub.s32 %s12, 2
      $region52: #{tpu_custom_call.1} parent=5 // pred_fallthru
        _
    $region6: #{tpu_custom_call.1} parent=1 // loop_footer
      %s16 = sadd.s32 1, %s12
    $region7: #{tpu_custom_call.1} parent=1 // loop_footer_branch
      %11 = sbr.rel target = $region3
    $region8: #{tpu_custom_call.1} parent=1 // loop_exit
      _
    %509 = vsyncpa [#allocation3], 1
    %s510 = scalar_lea.sflag [#allocation3], 1
    %511 = vsyncpa %s510, 1
    %512 = vsyncpa [#allocation5], 1

</llo_original>
